<compile_context>
chip_gen: v7x
topology: tpu7x:2x2x1
jax: 0.10.0
libtpu: 0.0.40
codegen_flags: <defaults>
</compile_context>

<pallas_src>
import functools
import math

import jax
import jax.numpy as jnp
from jax.experimental import pallas as pl
from jax.experimental.pallas import tpu as pltpu


def _round_up(a: int, b: int) -> int:
    return (a + b - 1) // b * b


def _round_down(a: int, b: int) -> int:
    return a // b * b


def _vmem_capacity_bytes() -> int:
    """Per-generation VMEM capacity; conservative fallback if unavailable."""
    try:
        info = pltpu.get_tpu_info()
        cap = getattr(info, "vmem_capacity_bytes", None)
        if cap:
            return int(cap)
    except Exception:
        pass
    return 64 << 20  # v7x per-TC physical VMEM (the smallest of v5e/v6e/v7x)


def _matmul_kernel(x_ref, w_ref, o_ref, *, cast_dtype):
    # x_ref: (TM, K) tile, w_ref: (K, N) resident weight (already scaled by
    # 1/norm), o_ref: (TM, N) tile.  f32 accumulation on the MXU.
    xb = x_ref[...]
    wb = w_ref[...]
    if cast_dtype is not None:
        xb = xb.astype(cast_dtype)  # in-kernel cast: no extra HBM pass over x
        wb = wb.astype(cast_dtype)
    o_ref[...] = jnp.dot(xb, wb, preferred_element_type=jnp.float32).astype(
        o_ref.dtype
    )


def _matmul_kernel_ktiled(x_ref, w_ref, o_ref, acc_ref, *, cast_dtype):
    # Grid = (M tiles, K tiles); K is last and "arbitrary"; acc_ref is an
    # f32 VMEM accumulator resident across the K axis.
    @pl.when(pl.program_id(1) == 0)
    def _():
        acc_ref[...] = jnp.zeros_like(acc_ref)

    xb = x_ref[...]
    wb = w_ref[...]
    if cast_dtype is not None:
        xb = xb.astype(cast_dtype)
        wb = wb.astype(cast_dtype)
    acc_ref[...] += jnp.dot(xb, wb, preferred_element_type=jnp.float32)

    @pl.when(pl.program_id(1) == pl.num_programs(1) - 1)
    def _():
        o_ref[...] = acc_ref[...].astype(o_ref.dtype)


def perceptron_forward(
    x,
    readout,
    norm,
    *,
    tm=1024,
    dot_dtype=None,
    out_dtype=None,
    k_block=None,
    force_pallas=False,
):
    """Perceptron forward: (x @ readout) / norm.

    x:         (batch, *, input_dim)
    readout:   (input_dim, out_dim)
    norm:      python scalar (module constant)
    dot_dtype: optional MXU-input dtype (e.g. jnp.bfloat16 on v6e/v7x);
               x is cast *inside* the kernel, accumulation stays f32.
               Note: products lose precision vs. the f32 PyTorch reference.
    k_block:   force a K tile size (multiple of 128 dividing input_dim).
    """
    *lead, input_dim = x.shape
    out_dim = readout.shape[1]
    m = math.prod(lead) if lead else 1
    x2d = x.reshape(m, input_dim)
    if out_dtype is None:
        out_dtype = x.dtype

    # Small-problem fast path: launch overhead / pipeline setup dominates for
    # a few tiles; XLA's fused dot wins on all generations.
    if not force_pallas and m * input_dim <= 4096:
        w_fp = readout.astype(x2d.dtype) / jnp.asarray(norm, dtype=x2d.dtype)
        return jnp.dot(x2d, w_fp).astype(out_dtype).reshape(*lead, out_dim)

    # Fold 1/norm into the small static weight once (no per-element VPU mul,
    # no SMEM scalar). Casting the tiny weight here is negligible.
    w = readout / jnp.asarray(norm, dtype=readout.dtype)
    if dot_dtype is not None:
        w = w.astype(dot_dtype)

    x_itemsize = jnp.dtype(x2d.dtype).itemsize
    w_itemsize = jnp.dtype(w.dtype).itemsize
    out_itemsize = jnp.dtype(out_dtype).itemsize

    # Output lane padding only when out_dim is already close to a multiple of
    # 128 (<=10% amplification); otherwise an unpadded (tm, out_dim) block is
    # legal (last block dim == full array dim) and avoids 8x write traffic.
    n_pad = _round_up(out_dim, 128)
    if n_pad != out_dim and n_pad * 10 <= out_dim * 11:
        w = jnp.pad(w, ((0, 0), (0, n_pad - out_dim)))
        n_eff = n_pad
    else:
        n_eff = out_dim

    # Per-generation VMEM budget; we set vmem_limit_bytes explicitly below so
    # we are not at the mercy of the 16/32 MiB scoped defaults.
    vmem_cap = _vmem_capacity_bytes()
    vmem_budget = min(int(vmem_cap * 0.6), 96 << 20)

    # K tiling: the resident-weight scheme breaks for large input_dim
    # (soonest on v7x's 64 MiB VMEM).  Weight is counted twice in case the
    # pipeline double-buffers the constant-index block.
    if k_block is not None:
        assert input_dim % k_block == 0
        assert k_block == input_dim or k_block % 128 == 0
        k_blk = k_block
    elif (2 * input_dim * n_eff * w_itemsize <= vmem_budget // 2
          or input_dim % 128 != 0):
        # TODO(synk): pad K (one extra pass over x) to enable K-tiling when
        # input_dim is huge but not a multiple of 128; also tile N for very
        # wide readouts.
        k_blk = input_dim
    else:
        k_blk = 128
        for f in range(input_dim // 128, 0, -1):
            cand = f * 128
            if (input_dim % cand == 0
                    and 2 * cand * n_eff * w_itemsize <= vmem_budget // 2):
                k_blk = cand
                break
    k_tiled = k_blk < input_dim

    # Row-tile size: start big (amortize ~0.35 us/step), clamp to the data,
    # keep >= 2 grid steps for v7x megacore when m is large, then shrink in
    # multiples of 8 sublanes until the footprint fits the VMEM budget.
    sublane = 8
    tm_eff = min(tm, _round_up(m, sublane))
    if m >= 512:
        tm_eff = min(tm_eff, _round_up(pl.cdiv(m, 2), sublane))

    def _footprint(t):
        f = 2 * t * (k_blk * x_itemsize + n_eff * out_itemsize)  # dbl-buffered
        f += 2 * k_blk * n_eff * w_itemsize                      # weight (x2)
        if k_tiled:
            f += t * n_eff * 4                                   # f32 acc
        return f

    while tm_eff > sublane and _footprint(tm_eff) > vmem_budget:
        tm_eff = max(sublane, _round_down(tm_eff // 2, sublane))

    grid_m = pl.cdiv(m, tm_eff)  # ragged last block: masked store, no x pad
    vmem_limit = int(min(vmem_cap * 0.9, _footprint(tm_eff) + (4 << 20)))

    cost = pl.CostEstimate(
        flops=2 * m * input_dim * n_eff,
        transcendentals=0,
        bytes_accessed=(
            x_itemsize * m * input_dim
            + w_itemsize * input_dim * n_eff
            + out_itemsize * m * n_eff
        ),
    )

    if k_tiled:
        grid = (grid_m, input_dim // k_blk)
        kernel = functools.partial(_matmul_kernel_ktiled, cast_dtype=dot_dtype)
        in_specs = [
            pl.BlockSpec((tm_eff, k_blk), lambda i, k: (i, k)),
            pl.BlockSpec((k_blk, n_eff), lambda i, k: (k, 0)),
        ]
        out_spec = pl.BlockSpec((tm_eff, n_eff), lambda i, k: (i, 0))
        scratch = [pltpu.VMEM((tm_eff, n_eff), jnp.float32)]
        semantics = ("parallel", "arbitrary")
    else:
        grid = (grid_m,)
        kernel = functools.partial(_matmul_kernel, cast_dtype=dot_dtype)
        in_specs = [
            pl.BlockSpec((tm_eff, input_dim), lambda i: (i, 0)),
            # Same block index every step -> weight stays resident in VMEM.
            pl.BlockSpec((input_dim, n_eff), lambda i: (0, 0)),
        ]
        out_spec = pl.BlockSpec((tm_eff, n_eff), lambda i: (i, 0))
        scratch = []
        semantics = ("parallel",)

    out2d = pl.pallas_call(
        kernel,
        out_shape=jax.ShapeDtypeStruct((m, n_eff), out_dtype),
        grid_spec=pl.GridSpec(
            grid=grid,
            in_specs=in_specs,
            out_specs=out_spec,
            scratch_shapes=scratch,
        ),
        compiler_params=pltpu.CompilerParams(
            dimension_semantics=semantics,
            vmem_limit_bytes=vmem_limit,
        ),
        cost_estimate=cost,
    )(x2d, w)

    if n_eff != out_dim:
        out2d = out2d[:, :out_dim]
    return out2d.reshape(*lead, out_dim)


if __name__ == "__main__":
    # Shapes implied by the module: x is (batch, *, input_dim).
    batch, seq, input_dim, out_dim = 2, 8, 32, 16
    norm = float(math.sqrt(input_dim))

    key = jax.random.PRNGKey(0)
    kx, kw, kx2, kx3, kw3 = jax.random.split(key, 5)
    x = jax.random.normal(kx, (batch, seq, input_dim), dtype=jnp.float32)
    # Deterministic init matching nn.Parameter(torch.randn(input_dim, out_dim))
    readout = jax.random.normal(kw, (input_dim, out_dim), dtype=jnp.float32)
    ref = (x @ readout) / norm

    # --- small case through the Pallas path (single tile, unpadded N) ----
    out = jax.block_until_ready(
        perceptron_forward(x, readout, norm, force_pallas=True)
    )
    assert out.shape == (batch, seq, out_dim)
    assert jnp.allclose(out, ref, atol=1e-5, rtol=1e-5)

    # --- same small case via the small-problem fast path ------------------
    out_fp = jax.block_until_ready(perceptron_forward(x, readout, norm))
    assert jnp.allclose(out_fp, ref, atol=1e-5, rtol=1e-5)

    # --- larger case: multi-tile grid with ragged last M block (no x pad) --
    x_big = jax.random.normal(kx2, (4, 300, input_dim), dtype=jnp.float32)
    out_big = jax.block_until_ready(
        perceptron_forward(x_big, readout, norm, tm=256)
    )
    ref_big = (x_big @ readout) / norm
    assert out_big.shape == (4, 300, out_dim)
    assert jnp.allclose(out_big, ref_big, atol=1e-5, rtol=1e-5)

    # --- K-tiled accumulator path (forced k_block to exercise it) ---------
    k_dim = 256
    norm_k = float(math.sqrt(k_dim))
    x_k = jax.random.normal(kx3, (2, 64, k_dim), dtype=jnp.float32)
    readout_k = jax.random.normal(kw3, (k_dim, out_dim), dtype=jnp.float32)
    out_k = jax.block_until_ready(
        perceptron_forward(
            x_k, readout_k, norm_k, k_block=128, force_pallas=True
        )
    )
    ref_k = (x_k @ readout_k) / norm_k
    assert out_k.shape == (2, 64, out_dim)
    assert jnp.allclose(out_k, ref_k, atol=1e-4, rtol=1e-4)

    # --- bf16 MXU-input path (in-kernel cast of x; f32 accumulation) ------
    out_bf16 = jax.block_until_ready(
        perceptron_forward(
            x, readout, norm, dot_dtype=jnp.bfloat16, force_pallas=True
        )
    )
    assert out_bf16.shape == (batch, seq, out_dim)
    assert jnp.allclose(out_bf16, ref, atol=1e-1, rtol=1e-1)

    print("KERNEL_OK")
</pallas_src>

<mosaic_0001>
module attributes {stable_mosaic.version = 11 : i64} {
  func.func @_matmul_kernel(%arg0: i32, %arg1: memref<16x32xf32, #tpu.memory_space<vmem>>, %arg2: memref<32x16xf32, #tpu.memory_space<vmem>>, %arg3: memref<16x16xf32, #tpu.memory_space<vmem>>) attributes {dimension_semantics = [#tpu.dimension_semantics<parallel>], iteration_bounds = array<i64: 1>, scalar_prefetch = 0 : i64, scratch_operands = 0 : i64, tpu.core_type = #tpu.core_type<tc>, window_params = [{transform_indices = @transform_0, window_bounds = array<i64: 16, 32>}, {pipeline_mode = #tpu.pipeline_mode<synchronous>, transform_indices = @transform_1, window_bounds = array<i64: 32, 16>}, {transform_indices = @transform_2, window_bounds = array<i64: 16, 16>}]} {
    %c0 = arith.constant 0 : index
    %c0_0 = arith.constant 0 : index
    %0 = vector.load %arg1[%c0, %c0_0] : memref<16x32xf32, #tpu.memory_space<vmem>>, vector<16x32xf32>
    %c0_1 = arith.constant 0 : index
    %c0_2 = arith.constant 0 : index
    %1 = vector.load %arg2[%c0_1, %c0_2] : memref<32x16xf32, #tpu.memory_space<vmem>>, vector<32x16xf32>
    %cst = arith.constant dense<0.000000e+00> : vector<16x16xf32>
    %2 = tpu.matmul %0, %1, %cst {dimension_numbers = #tpu.dot_dimension_numbers<[1], [0], [0], [1], [0, 0, 1, 1], [], []>} : vector<16x32xf32>, vector<32x16xf32>, vector<16x16xf32> -> vector<16x16xf32>
    %c0_3 = arith.constant 0 : index
    %c0_4 = arith.constant 0 : index
    %3 = vector.load %arg3[%c0_3, %c0_4] : memref<16x16xf32, #tpu.memory_space<vmem>>, vector<16x16xf32>
    tpu.vector_store %arg3[%c0_3, %c0_4], %2 {strides = array<i32>} : memref<16x16xf32, #tpu.memory_space<vmem>>, vector<16x16xf32>,
    return
  }
  func.func @transform_0(%arg0: i32) -> (i32, i32) {
    %c0_i32 = arith.constant 0 : i32
    %c0_i32_0 = arith.constant 0 : i32
    return %arg0, %c0_i32 : i32, i32
  }
  func.func @transform_1(%arg0: i32) -> (i32, i32) {
    %c0_i32 = arith.constant 0 : i32
    %c0_i32_0 = arith.constant 0 : i32
    %c0_i32_1 = arith.constant 0 : i32
    return %c0_i32, %c0_i32_0 : i32, i32
  }
  func.func @transform_2(%arg0: i32) -> (i32, i32) {
    %c0_i32 = arith.constant 0 : i32
    %c0_i32_0 = arith.constant 0 : i32
    return %arg0, %c0_i32 : i32, i32
  }
}

</mosaic_0001>

<llo_original>
// kernel: tpu_custom_call.1
$region0: #{tpu_custom_call.1}
  #allocation0 [shape = 'u32[]', space=smem, size = 0x4, offset = 0x4, fixed_abs, tag = 'smem constant byte address 0x4 - core index']
  #allocation1 [shape = 'u32[144,128]{1,0:T(1,128)}', space=vmem, size = 0x12000, scoped, tag = 'internal scratch']
  %s0 = inlined_call_operand.vmem [shape: f32[16,32], index: 0, kind: input, shape index: {}]
  %s1 = inlined_call_operand.vmem [shape: f32[32,16], index: 1, kind: input, shape index: {}]
  %s2 = inlined_call_operand.hbm [shape: f32[16,16], index: 2, kind: output, shape index: {}]
  %s3 = sld [smem:[#allocation0]]
  $region18: #{tpu_custom_call.1} parent=0
    _
  %s5 = ssub.s32 1, %s3
  %s6 = scalar_select 0, %s5, %s3
  $region1: #{tpu_custom_call.1} parent=0
    #allocation2 [shape = 'u8[8192]{0}', space=vmem, size = 0x2000, scoped, tag = 'output window, operand 0, single buffered']
    #allocation3 [shape = 's32[1]{0}', space=sflag, size = 0x4, scoped, tag = 'scoped memory for tpu_custom_call.1']
    %7 = vsyncpa [#allocation3], 0
    // Predicated region
    $region2: #{tpu_custom_call.1} parent=1 // pred_check
      _
    $region3: #{tpu_custom_call.1} parent=1 // pred_check_branch
      %9 = sbr.rel (0) target = $region5
    $region4: #{tpu_custom_call.1} parent=1 // pred_region
      _
    $region5: #{tpu_custom_call.1} parent=1 // pred_fallthru
      _
    // Predicated region
    $region6: #{tpu_custom_call.1} parent=1 // pred_check
      _
    $region7: #{tpu_custom_call.1} parent=1 // pred_check_branch
      %11 = sbr.rel (0) target = $region9
    $region8: #{tpu_custom_call.1} parent=1 // pred_region
      _
    $region9: #{tpu_custom_call.1} parent=1 // pred_fallthru
      _
    %v12 = vld [vmem:[%s0] sm:$0xff]
    %v13 = vld [vmem:[%s0 + $0x8] sm:$0xff]
    %v14 = vld [vmem:[%s1] sm:$0xff]
    %v15 = vld [vmem:[%s1 + $0x8] sm:$0xff]
    %v16 = vld [vmem:[%s1 + $0x10] sm:$0xff]
    %v17 = vld [vmem:[%s1 + $0x18] sm:$0xff]
    %vm18 = vcmask 261120
    %v20 = vsel %vm18, %v12, 0
    %v23 = vsel %vm18, %v13, 0
    %25 = vmatprep.subr.mxu0 0.0
    %26 = vmatpush1.msra.mxu0 %v14
    %27 = vmatprep.subr.mxu0 0.0
    %28 = vmatpush1.msra.mxu0 %v15
    %29 = vmatprep.subr.mxu0 0.0
    %30 = vmatpush1.msra.mxu0 %v16
    %31 = vmatprep.subr.mxu0 0.0
    %32 = vmatpush1.msra.mxu0 %v17
    %33 = vmatprep.subr.mxu0 0.0
    %34 = vmatpush1.msra.mxu0 0.0
    %35 = vmatprep.subr.mxu0 0.0
    %36 = vmatpush1.msra.mxu0 0.0
    %37 = vmatprep.subr.mxu0 0.0
    %38 = vmatpush1.msra.mxu0 0.0
    %39 = vmatprep.subr.mxu0 0.0
    %40 = vmatpush1.msra.mxu0 0.0
    %41 = vmatprep.subr.mxu0 0.0
    %42 = vmatpush1.msra.mxu0 0.0
    %43 = vmatprep.subr.mxu0 0.0
    %44 = vmatpush1.msra.mxu0 0.0
    %45 = vmatprep.subr.mxu0 0.0
    %46 = vmatpush1.msra.mxu0 0.0
    %47 = vmatprep.subr.mxu0 0.0
    %48 = vmatpush1.msra.mxu0 0.0
    %49 = vmatprep.subr.mxu0 0.0
    %50 = vmatpush1.msra.mxu0 0.0
    %51 = vmatprep.subr.mxu0 0.0
    %52 = vmatpush1.msra.mxu0 0.0
    %53 = vmatprep.subr.mxu0 0.0
    %54 = vmatpush1.msra.mxu0 0.0
    %55 = vmatprep.subr.mxu0 0.0
    %56 = vmatpush1.msra.mxu0 0.0
    %57 = vmatprep.subr.mxu0 0.0
    %58 = vmatpush1.msra.mxu0 0.0
    %59 = vmatprep.subr.mxu0 0.0
    %60 = vmatpush1.msra.mxu0 0.0
    %61 = vmatprep.subr.mxu0 0.0
    %62 = vmatpush1.msra.mxu0 0.0
    %63 = vmatprep.subr.mxu0 0.0
    %64 = vmatpush1.msra.mxu0 0.0
    %65 = vmatprep.subr.mxu0 0.0
    %66 = vmatpush1.msra.mxu0 0.0
    %67 = vmatprep.subr.mxu0 0.0
    %68 = vmatpush1.msra.mxu0 0.0
    %69 = vmatprep.subr.mxu0 0.0
    %70 = vmatpush1.msra.mxu0 0.0
    %71 = vmatprep.subr.mxu0 0.0
    %72 = vmatpush1.msra.mxu0 0.0
    %73 = vmatprep.subr.mxu0 0.0
    %74 = vmatpush1.msra.mxu0 0.0
    %75 = vmatprep.subr.mxu0 0.0
    %76 = vmatpush1.msra.mxu0 0.0
    %77 = vmatprep.subr.mxu0 0.0
    %78 = vmatpush1.msra.mxu0 0.0
    %79 = vmatprep.subr.mxu0 0.0
    %80 = vmatpush1.msra.mxu0 0.0
    %81 = vmatprep.subr.mxu0 0.0
    %82 = vmatpush1.msra.mxu0 0.0
    %83 = vmatprep.subr.mxu0 0.0
    %84 = vmatpush1.msra.mxu0 0.0
    %85 = vmatprep.subr.mxu0 0.0
    %86 = vmatpush1.msra.mxu0 0.0
    %87 = vmatprep.subr.mxu0 0.0
    %88 = vmatpush1.msra.mxu0 0.0
    %89 = vmatprep.mubr.f32.mxu0 0.0
    %90 = vmatmul.mubr.f32.gmra.mrb[0].mxu0 %v20
    %v91 = vpop.f32.mrb[0].mxu0
    %v92 = vadd.f32 0.0, %v91
    %v93 = vpop.f32.mrb[0].mxu0
    %94 = vmatprep.mubr.f32.mxu0 0.0
    %95 = vmatmul.mubr.f32.gmra.mrb[0].mxu0 %v23
    %v96 = vpop.f32.mrb[0].mxu0
    %v97 = vadd.f32 0.0, %v96
    %v98 = vpop.f32.mrb[0].mxu0
    %99 = vdwg.mxu0
    %vm100 = vcmask 130048
    %101 = vst.msk [vmem:[#allocation2] sm:$0xff] %vm100, %v92
    %102 = vst.msk [vmem:[#allocation2 + $0x8] sm:$0xff] %vm100, %v97
    // Predicated region
    $region10: #{tpu_custom_call.1} parent=1 // pred_check
      _
    $region11: #{tpu_custom_call.1} parent=1 // pred_check_branch
      %104 = sbr.rel (0) target = $region13
    $region12: #{tpu_custom_call.1} parent=1 // pred_region
      %s106 = ssub.s32 256, 256
      %107 = vsyncadd [#allocation3], %s106
      %s108 = sshll.u32 [#allocation2], 4
      %s109 = int_to_ptr.vmem [resolvable:$true] %s108
      %114 = dma.vmem_to_hbm [thread:$0]  %s109, 256, %s2, [#allocation3], 128, 128, 8
    $region13: #{tpu_custom_call.1} parent=1 // pred_fallthru
      _
    // Predicated region
    $region14: #{tpu_custom_call.1} parent=1 // pred_check
      _
    $region15: #{tpu_custom_call.1} parent=1 // pred_check_branch
      %116 = sbr.rel (0) target = $region17
    $region16: #{tpu_custom_call.1} parent=1 // pred_region
      %117 = dma.done [#allocation3], 256
    $region17: #{tpu_custom_call.1} parent=1 // pred_fallthru
      _
    %118 = vsyncpa [#allocation3], 1

</llo_original>
